<compile_context>
chip_gen: v5e
topology: v5e:2x2
jax: 0.10.0
libtpu: 0.0.40
codegen_flags: <defaults>
</compile_context>

<pallas_src>
import numpy as np
import jax
import jax.numpy as jnp
from jax.experimental import pallas as pl
from jax.experimental.pallas import tpu as pltpu

EPS = 1e-5  # PyTorch BatchNorm1d default


def basic_block_kernel(x_ref, w1_ref, b1_ref, g1_ref, be1_ref,
                       w2_ref, b2_ref, g2_ref, be2_ref, o_ref):
    # x_ref : (N, Cin, L)        PyTorch-native NCL; L sits on the 128-lane axis (dense data).
    # w*_ref: (Cin*K, Cout, 1)   row index = ci*K + k -> per-tap column of output-channel weights.
    # b*/g*/be*_ref: (Cout, 1)   conv bias / BN gamma / BN beta.
    x = x_ref[...]
    n, cin, l = x.shape
    c1 = w1_ref.shape[1]
    k_taps = w1_ref.shape[0] // cin
    l1 = l - (k_taps - 1)            # stride=1, padding=0, dilation=1
    l2 = l1 - (k_taps - 1)

    def conv_bn_relu(a, cin_, lout, w_ref, b_ref, g_ref, be_ref):
        cout = w_ref.shape[1]
        # Conv1d as Cin*K shifted broadcast multiply-adds on the VPU.  Each tap k is a lane
        # shift of the (N, C, L) tile; no im2col buffer, no MXU, no padded channels.
        acc = jnp.broadcast_to(b_ref[...], (n, cout, lout))
        for ci in range(cin_):
            for k in range(k_taps):
                # (Cout,1) weight column  x  (N,1,Lout) shifted input row  ->  (N,Cout,Lout)
                acc = acc + w_ref[ci * k_taps + k] * a[:, ci:ci + 1, k:k + lout]

        # BatchNorm1d (training-mode batch statistics) over (N, Lout) per channel.
        # Two-pass form (mean, then centered sum of squares) avoids E[x^2]-E[x]^2 cancellation.
        inv_cnt = 1.0 / (n * lout)
        mu = jnp.sum(acc, axis=(0, 2), keepdims=True) * inv_cnt           # (1, Cout, 1)
        cent = acc - mu
        var = jnp.sum(cent * cent, axis=(0, 2), keepdims=True) * inv_cnt  # (1, Cout, 1)
        scale = g_ref[...] * jax.lax.rsqrt(var + EPS)                     # fused BN affine
        return jnp.maximum(cent * scale + be_ref[...], 0.0)               # + ReLU

    h1 = conv_bn_relu(x, cin, l1, w1_ref, b1_ref, g1_ref, be1_ref)        # (N, C1, L1)
    o_ref[...] = conv_bn_relu(h1, c1, l2, w2_ref, b2_ref, g2_ref, be2_ref)  # (N, C2, L2)


def basic_block_forward(x_ncl, params):
    """x_ncl: (N, Cin, L) f32 -> (N, Cout, Lout) f32 (PyTorch BasicBlock forward)."""
    N, Cin, L = x_ncl.shape
    w1, b1, g1, be1 = params['w1'], params['b1'], params['g1'], params['be1']
    w2, b2, g2, be2 = params['w2'], params['b2'], params['g2'], params['be2']
    C1, _, K = w1.shape
    C2 = w2.shape[0]
    L2 = L - 2 * (K - 1)

    def pack_w(w):
        # PyTorch (Cout, Cin, K) -> (Cin*K, Cout, 1); row index = ci*K + k (matches kernel loop).
        cout, cin, k = w.shape
        return jnp.transpose(w, (1, 2, 0)).reshape(cin * k, cout)[..., None]

    def col(v):
        return v.reshape(v.shape[0], 1)

    vmem = pl.BlockSpec(memory_space=pltpu.MemorySpace.VMEM)
    return pl.pallas_call(
        basic_block_kernel,
        out_shape=jax.ShapeDtypeStruct((N, C2, L2), jnp.float32),
        in_specs=[vmem] * 9,
        out_specs=vmem,
        compiler_params=pltpu.CompilerParams(
            vmem_limit_bytes=32 * 1024 * 1024),  # ample for this footprint on v5e/v6e/v7x
    )(x_ncl, pack_w(w1), col(b1), col(g1), col(be1),
      pack_w(w2), col(b2), col(g2), col(be2))


def reference_forward(x, params):
    """Pure-JAX reference of the PyTorch module forward (NCL layout, training-mode BN)."""
    def conv1d(x, w, b):
        y = jax.lax.conv_general_dilated(
            x, w, window_strides=(1,), padding='VALID',
            dimension_numbers=('NCH', 'OIH', 'NCH'))
        return y + b[None, :, None]

    def bn_relu(x, g, be):
        mu = x.mean(axis=(0, 2), keepdims=True)
        var = ((x - mu) ** 2).mean(axis=(0, 2), keepdims=True)
        y = (x - mu) / jnp.sqrt(var + EPS) * g[None, :, None] + be[None, :, None]
        return jnp.maximum(y, 0.0)

    h = bn_relu(conv1d(x, params['w1'], params['b1']), params['g1'], params['be1'])
    h = bn_relu(conv1d(h, params['w2'], params['b2']), params['g2'], params['be2'])
    return h


if __name__ == "__main__":
    # Small shapes consistent with the module: BasicBlock(inchannels=4, outchannels=8)
    N, Cin, L = 2, 4, 16
    Cout, K = 8, 3

    key = jax.random.PRNGKey(0)
    ks = jax.random.split(key, 9)
    params = {
        'w1': jax.random.normal(ks[0], (Cout, Cin, K), jnp.float32) * 0.3,   # PyTorch (O, I, K)
        'b1': jax.random.normal(ks[1], (Cout,), jnp.float32) * 0.1,
        'g1': 1.0 + jax.random.normal(ks[2], (Cout,), jnp.float32) * 0.1,
        'be1': jax.random.normal(ks[3], (Cout,), jnp.float32) * 0.1,
        'w2': jax.random.normal(ks[4], (Cout, Cout, K), jnp.float32) * 0.3,
        'b2': jax.random.normal(ks[5], (Cout,), jnp.float32) * 0.1,
        'g2': 1.0 + jax.random.normal(ks[6], (Cout,), jnp.float32) * 0.1,
        'be2': jax.random.normal(ks[7], (Cout,), jnp.float32) * 0.1,
    }
    x = jax.random.normal(ks[8], (N, Cin, L), jnp.float32)

    out = jax.block_until_ready(basic_block_forward(x, params))
    ref = jax.block_until_ready(reference_forward(x, params))

    assert out.shape == (N, Cout, L - 2 * (K - 1)), out.shape
    np.testing.assert_allclose(np.asarray(out), np.asarray(ref), rtol=1e-4, atol=1e-4)
    print("KERNEL_OK")
</pallas_src>

<mosaic_0001>
module attributes {stable_mosaic.version = 11 : i64} {
  func.func @basic_block_kernel(%arg0: memref<2x4x16xf32, #tpu.memory_space<vmem>>, %arg1: memref<12x8x1xf32, #tpu.memory_space<vmem>>, %arg2: memref<8x1xf32, #tpu.memory_space<vmem>>, %arg3: memref<8x1xf32, #tpu.memory_space<vmem>>, %arg4: memref<8x1xf32, #tpu.memory_space<vmem>>, %arg5: memref<24x8x1xf32, #tpu.memory_space<vmem>>, %arg6: memref<8x1xf32, #tpu.memory_space<vmem>>, %arg7: memref<8x1xf32, #tpu.memory_space<vmem>>, %arg8: memref<8x1xf32, #tpu.memory_space<vmem>>, %arg9: memref<2x8x12xf32, #tpu.memory_space<vmem>>) attributes {dimension_semantics = [], scalar_prefetch = 0 : i64, scratch_operands = 0 : i64, tpu.core_type = #tpu.core_type<tc>} {
    %c0 = arith.constant 0 : index
    %c0_0 = arith.constant 0 : index
    %c0_1 = arith.constant 0 : index
    %0 = vector.load %arg0[%c0, %c0_0, %c0_1] : memref<2x4x16xf32, #tpu.memory_space<vmem>>, vector<2x4x16xf32>
    %c0_2 = arith.constant 0 : index
    %c0_3 = arith.constant 0 : index
    %1 = vector.load %arg2[%c0_2, %c0_3] : memref<8x1xf32, #tpu.memory_space<vmem>>, vector<8x1xf32>
    %2 = vector.shape_cast %1 : vector<8x1xf32> to vector<1x8x1xf32>
    %3 = vector.broadcast %2 : vector<1x8x1xf32> to vector<2x8x14xf32>
    %c0_4 = arith.constant 0 : index
    %c0_5 = arith.constant 0 : index
    %c0_6 = arith.constant 0 : index
    %4 = vector.load %arg1[%c0_4, %c0_5, %c0_6] : memref<12x8x1xf32, #tpu.memory_space<vmem>>, vector<1x8x1xf32>
    %5 = vector.shape_cast %4 : vector<1x8x1xf32> to vector<8x1xf32>
    %6 = vector.extract_strided_slice %0 {offsets = [0, 0, 0], sizes = [2, 1, 14], strides = [1, 1, 1]} : vector<2x4x16xf32> to vector<2x1x14xf32>
    %7 = vector.shape_cast %5 : vector<8x1xf32> to vector<1x8x1xf32>
    %8 = vector.broadcast %7 : vector<1x8x1xf32> to vector<2x8x14xf32>
    %9 = vector.broadcast %6 : vector<2x1x14xf32> to vector<2x8x14xf32>
    %10 = arith.mulf %8, %9 : vector<2x8x14xf32>
    %11 = arith.addf %3, %10 : vector<2x8x14xf32>
    %c1 = arith.constant 1 : index
    %c0_7 = arith.constant 0 : index
    %c0_8 = arith.constant 0 : index
    %12 = vector.load %arg1[%c1, %c0_7, %c0_8] : memref<12x8x1xf32, #tpu.memory_space<vmem>>, vector<1x8x1xf32>
    %13 = vector.shape_cast %12 : vector<1x8x1xf32> to vector<8x1xf32>
    %14 = vector.extract_strided_slice %0 {offsets = [0, 0, 1], sizes = [2, 1, 14], strides = [1, 1, 1]} : vector<2x4x16xf32> to vector<2x1x14xf32>
    %15 = vector.shape_cast %13 : vector<8x1xf32> to vector<1x8x1xf32>
    %16 = vector.broadcast %15 : vector<1x8x1xf32> to vector<2x8x14xf32>
    %17 = vector.broadcast %14 : vector<2x1x14xf32> to vector<2x8x14xf32>
    %18 = arith.mulf %16, %17 : vector<2x8x14xf32>
    %19 = arith.addf %11, %18 : vector<2x8x14xf32>
    %c2 = arith.constant 2 : index
    %c0_9 = arith.constant 0 : index
    %c0_10 = arith.constant 0 : index
    %20 = vector.load %arg1[%c2, %c0_9, %c0_10] : memref<12x8x1xf32, #tpu.memory_space<vmem>>, vector<1x8x1xf32>
    %21 = vector.shape_cast %20 : vector<1x8x1xf32> to vector<8x1xf32>
    %22 = vector.extract_strided_slice %0 {offsets = [0, 0, 2], sizes = [2, 1, 14], strides = [1, 1, 1]} : vector<2x4x16xf32> to vector<2x1x14xf32>
    %23 = vector.shape_cast %21 : vector<8x1xf32> to vector<1x8x1xf32>
    %24 = vector.broadcast %23 : vector<1x8x1xf32> to vector<2x8x14xf32>
    %25 = vector.broadcast %22 : vector<2x1x14xf32> to vector<2x8x14xf32>
    %26 = arith.mulf %24, %25 : vector<2x8x14xf32>
    %27 = arith.addf %19, %26 : vector<2x8x14xf32>
    %c3 = arith.constant 3 : index
    %c0_11 = arith.constant 0 : index
    %c0_12 = arith.constant 0 : index
    %28 = vector.load %arg1[%c3, %c0_11, %c0_12] : memref<12x8x1xf32, #tpu.memory_space<vmem>>, vector<1x8x1xf32>
    %29 = vector.shape_cast %28 : vector<1x8x1xf32> to vector<8x1xf32>
    %30 = vector.extract_strided_slice %0 {offsets = [0, 1, 0], sizes = [2, 1, 14], strides = [1, 1, 1]} : vector<2x4x16xf32> to vector<2x1x14xf32>
    %31 = vector.shape_cast %29 : vector<8x1xf32> to vector<1x8x1xf32>
    %32 = vector.broadcast %31 : vector<1x8x1xf32> to vector<2x8x14xf32>
    %33 = vector.broadcast %30 : vector<2x1x14xf32> to vector<2x8x14xf32>
    %34 = arith.mulf %32, %33 : vector<2x8x14xf32>
    %35 = arith.addf %27, %34 : vector<2x8x14xf32>
    %c4 = arith.constant 4 : index
    %c0_13 = arith.constant 0 : index
    %c0_14 = arith.constant 0 : index
    %36 = vector.load %arg1[%c4, %c0_13, %c0_14] : memref<12x8x1xf32, #tpu.memory_space<vmem>>, vector<1x8x1xf32>
    %37 = vector.shape_cast %36 : vector<1x8x1xf32> to vector<8x1xf32>
    %38 = vector.extract_strided_slice %0 {offsets = [0, 1, 1], sizes = [2, 1, 14], strides = [1, 1, 1]} : vector<2x4x16xf32> to vector<2x1x14xf32>
    %39 = vector.shape_cast %37 : vector<8x1xf32> to vector<1x8x1xf32>
    %40 = vector.broadcast %39 : vector<1x8x1xf32> to vector<2x8x14xf32>
    %41 = vector.broadcast %38 : vector<2x1x14xf32> to vector<2x8x14xf32>
    %42 = arith.mulf %40, %41 : vector<2x8x14xf32>
    %43 = arith.addf %35, %42 : vector<2x8x14xf32>
    %c5 = arith.constant 5 : index
    %c0_15 = arith.constant 0 : index
    %c0_16 = arith.constant 0 : index
    %44 = vector.load %arg1[%c5, %c0_15, %c0_16] : memref<12x8x1xf32, #tpu.memory_space<vmem>>, vector<1x8x1xf32>
    %45 = vector.shape_cast %44 : vector<1x8x1xf32> to vector<8x1xf32>
    %46 = vector.extract_strided_slice %0 {offsets = [0, 1, 2], sizes = [2, 1, 14], strides = [1, 1, 1]} : vector<2x4x16xf32> to vector<2x1x14xf32>
    %47 = vector.shape_cast %45 : vector<8x1xf32> to vector<1x8x1xf32>
    %48 = vector.broadcast %47 : vector<1x8x1xf32> to vector<2x8x14xf32>
    %49 = vector.broadcast %46 : vector<2x1x14xf32> to vector<2x8x14xf32>
    %50 = arith.mulf %48, %49 : vector<2x8x14xf32>
    %51 = arith.addf %43, %50 : vector<2x8x14xf32>
    %c6 = arith.constant 6 : index
    %c0_17 = arith.constant 0 : index
    %c0_18 = arith.constant 0 : index
    %52 = vector.load %arg1[%c6, %c0_17, %c0_18] : memref<12x8x1xf32, #tpu.memory_space<vmem>>, vector<1x8x1xf32>
    %53 = vector.shape_cast %52 : vector<1x8x1xf32> to vector<8x1xf32>
    %54 = vector.extract_strided_slice %0 {offsets = [0, 2, 0], sizes = [2, 1, 14], strides = [1, 1, 1]} : vector<2x4x16xf32> to vector<2x1x14xf32>
    %55 = vector.shape_cast %53 : vector<8x1xf32> to vector<1x8x1xf32>
    %56 = vector.broadcast %55 : vector<1x8x1xf32> to vector<2x8x14xf32>
    %57 = vector.broadcast %54 : vector<2x1x14xf32> to vector<2x8x14xf32>
    %58 = arith.mulf %56, %57 : vector<2x8x14xf32>
    %59 = arith.addf %51, %58 : vector<2x8x14xf32>
    %c7 = arith.constant 7 : index
    %c0_19 = arith.constant 0 : index
    %c0_20 = arith.constant 0 : index
    %60 = vector.load %arg1[%c7, %c0_19, %c0_20] : memref<12x8x1xf32, #tpu.memory_space<vmem>>, vector<1x8x1xf32>
    %61 = vector.shape_cast %60 : vector<1x8x1xf32> to vector<8x1xf32>
    %62 = vector.extract_strided_slice %0 {offsets = [0, 2, 1], sizes = [2, 1, 14], strides = [1, 1, 1]} : vector<2x4x16xf32> to vector<2x1x14xf32>
    %63 = vector.shape_cast %61 : vector<8x1xf32> to vector<1x8x1xf32>
    %64 = vector.broadcast %63 : vector<1x8x1xf32> to vector<2x8x14xf32>
    %65 = vector.broadcast %62 : vector<2x1x14xf32> to vector<2x8x14xf32>
    %66 = arith.mulf %64, %65 : vector<2x8x14xf32>
    %67 = arith.addf %59, %66 : vector<2x8x14xf32>
    %c8 = arith.constant 8 : index
    %c0_21 = arith.constant 0 : index
    %c0_22 = arith.constant 0 : index
    %68 = vector.load %arg1[%c8, %c0_21, %c0_22] : memref<12x8x1xf32, #tpu.memory_space<vmem>>, vector<1x8x1xf32>
    %69 = vector.shape_cast %68 : vector<1x8x1xf32> to vector<8x1xf32>
    %70 = vector.extract_strided_slice %0 {offsets = [0, 2, 2], sizes = [2, 1, 14], strides = [1, 1, 1]} : vector<2x4x16xf32> to vector<2x1x14xf32>
    %71 = vector.shape_cast %69 : vector<8x1xf32> to vector<1x8x1xf32>
    %72 = vector.broadcast %71 : vector<1x8x1xf32> to vector<2x8x14xf32>
    %73 = vector.broadcast %70 : vector<2x1x14xf32> to vector<2x8x14xf32>
    %74 = arith.mulf %72, %73 : vector<2x8x14xf32>
    %75 = arith.addf %67, %74 : vector<2x8x14xf32>
    %c9 = arith.constant 9 : index
    %c0_23 = arith.constant 0 : index
    %c0_24 = arith.constant 0 : index
    %76 = vector.load %arg1[%c9, %c0_23, %c0_24] : memref<12x8x1xf32, #tpu.memory_space<vmem>>, vector<1x8x1xf32>
    %77 = vector.shape_cast %76 : vector<1x8x1xf32> to vector<8x1xf32>
    %78 = vector.extract_strided_slice %0 {offsets = [0, 3, 0], sizes = [2, 1, 14], strides = [1, 1, 1]} : vector<2x4x16xf32> to vector<2x1x14xf32>
    %79 = vector.shape_cast %77 : vector<8x1xf32> to vector<1x8x1xf32>
    %80 = vector.broadcast %79 : vector<1x8x1xf32> to vector<2x8x14xf32>
    %81 = vector.broadcast %78 : vector<2x1x14xf32> to vector<2x8x14xf32>
    %82 = arith.mulf %80, %81 : vector<2x8x14xf32>
    %83 = arith.addf %75, %82 : vector<2x8x14xf32>
    %c10 = arith.constant 10 : index
    %c0_25 = arith.constant 0 : index
    %c0_26 = arith.constant 0 : index
    %84 = vector.load %arg1[%c10, %c0_25, %c0_26] : memref<12x8x1xf32, #tpu.memory_space<vmem>>, vector<1x8x1xf32>
    %85 = vector.shape_cast %84 : vector<1x8x1xf32> to vector<8x1xf32>
    %86 = vector.extract_strided_slice %0 {offsets = [0, 3, 1], sizes = [2, 1, 14], strides = [1, 1, 1]} : vector<2x4x16xf32> to vector<2x1x14xf32>
    %87 = vector.shape_cast %85 : vector<8x1xf32> to vector<1x8x1xf32>
    %88 = vector.broadcast %87 : vector<1x8x1xf32> to vector<2x8x14xf32>
    %89 = vector.broadcast %86 : vector<2x1x14xf32> to vector<2x8x14xf32>
    %90 = arith.mulf %88, %89 : vector<2x8x14xf32>
    %91 = arith.addf %83, %90 : vector<2x8x14xf32>
    %c11 = arith.constant 11 : index
    %c0_27 = arith.constant 0 : index
    %c0_28 = arith.constant 0 : index
    %92 = vector.load %arg1[%c11, %c0_27, %c0_28] : memref<12x8x1xf32, #tpu.memory_space<vmem>>, vector<1x8x1xf32>
    %93 = vector.shape_cast %92 : vector<1x8x1xf32> to vector<8x1xf32>
    %94 = vector.extract_strided_slice %0 {offsets = [0, 3, 2], sizes = [2, 1, 14], strides = [1, 1, 1]} : vector<2x4x16xf32> to vector<2x1x14xf32>
    %95 = vector.shape_cast %93 : vector<8x1xf32> to vector<1x8x1xf32>
    %96 = vector.broadcast %95 : vector<1x8x1xf32> to vector<2x8x14xf32>
    %97 = vector.broadcast %94 : vector<2x1x14xf32> to vector<2x8x14xf32>
    %98 = arith.mulf %96, %97 : vector<2x8x14xf32>
    %99 = arith.addf %91, %98 : vector<2x8x14xf32>
    %cst = arith.constant dense<0.000000e+00> : vector<8xf32>
    %100 = vector.multi_reduction <add>, %99, %cst [0, 2] : vector<2x8x14xf32> to vector<8xf32>
    %101 = vector.shape_cast %100 : vector<8xf32> to vector<1x8x1xf32>
    %cst_29 = arith.constant 0.0357142873 : f32
    %102 = vector.broadcast %cst_29 : f32 to vector<1x8x1xf32>
    %103 = arith.mulf %101, %102 : vector<1x8x1xf32>
    %104 = vector.broadcast %103 : vector<1x8x1xf32> to vector<2x8x14xf32>
    %105 = arith.subf %99, %104 : vector<2x8x14xf32>
    %106 = arith.mulf %105, %105 : vector<2x8x14xf32>
    %cst_30 = arith.constant dense<0.000000e+00> : vector<8xf32>
    %107 = vector.multi_reduction <add>, %106, %cst_30 [0, 2] : vector<2x8x14xf32> to vector<8xf32>
    %108 = vector.shape_cast %107 : vector<8xf32> to vector<1x8x1xf32>
    %cst_31 = arith.constant 0.0357142873 : f32
    %109 = vector.broadcast %cst_31 : f32 to vector<1x8x1xf32>
    %110 = arith.mulf %108, %109 : vector<1x8x1xf32>
    %c0_32 = arith.constant 0 : index
    %c0_33 = arith.constant 0 : index
    %111 = vector.load %arg3[%c0_32, %c0_33] : memref<8x1xf32, #tpu.memory_space<vmem>>, vector<8x1xf32>
    %cst_34 = arith.constant 9.99999974E-6 : f32
    %112 = vector.broadcast %cst_34 : f32 to vector<1x8x1xf32>
    %113 = arith.addf %110, %112 : vector<1x8x1xf32>
    %114 = math.rsqrt %113 : vector<1x8x1xf32>
    %115 = vector.shape_cast %111 : vector<8x1xf32> to vector<1x8x1xf32>
    %116 = arith.mulf %115, %114 : vector<1x8x1xf32>
    %117 = vector.broadcast %116 : vector<1x8x1xf32> to vector<2x8x14xf32>
    %118 = arith.mulf %105, %117 : vector<2x8x14xf32>
    %c0_35 = arith.constant 0 : index
    %c0_36 = arith.constant 0 : index
    %119 = vector.load %arg4[%c0_35, %c0_36] : memref<8x1xf32, #tpu.memory_space<vmem>>, vector<8x1xf32>
    %120 = vector.shape_cast %119 : vector<8x1xf32> to vector<1x8x1xf32>
    %121 = vector.broadcast %120 : vector<1x8x1xf32> to vector<2x8x14xf32>
    %122 = arith.addf %118, %121 : vector<2x8x14xf32>
    %cst_37 = arith.constant 0.000000e+00 : f32
    %123 = vector.broadcast %cst_37 : f32 to vector<2x8x14xf32>
    %124 = arith.maximumf %122, %123 : vector<2x8x14xf32>
    %c0_38 = arith.constant 0 : index
    %c0_39 = arith.constant 0 : index
    %125 = vector.load %arg6[%c0_38, %c0_39] : memref<8x1xf32, #tpu.memory_space<vmem>>, vector<8x1xf32>
    %126 = vector.shape_cast %125 : vector<8x1xf32> to vector<1x8x1xf32>
    %127 = vector.broadcast %126 : vector<1x8x1xf32> to vector<2x8x12xf32>
    %c0_40 = arith.constant 0 : index
    %c0_41 = arith.constant 0 : index
    %c0_42 = arith.constant 0 : index
    %128 = vector.load %arg5[%c0_40, %c0_41, %c0_42] : memref<24x8x1xf32, #tpu.memory_space<vmem>>, vector<1x8x1xf32>
    %129 = vector.shape_cast %128 : vector<1x8x1xf32> to vector<8x1xf32>
    %130 = vector.extract_strided_slice %124 {offsets = [0, 0, 0], sizes = [2, 1, 12], strides = [1, 1, 1]} : vector<2x8x14xf32> to vector<2x1x12xf32>
    %131 = vector.shape_cast %129 : vector<8x1xf32> to vector<1x8x1xf32>
    %132 = vector.broadcast %131 : vector<1x8x1xf32> to vector<2x8x12xf32>
    %133 = vector.broadcast %130 : vector<2x1x12xf32> to vector<2x8x12xf32>
    %134 = arith.mulf %132, %133 : vector<2x8x12xf32>
    %135 = arith.addf %127, %134 : vector<2x8x12xf32>
    %c1_43 = arith.constant 1 : index
    %c0_44 = arith.constant 0 : index
    %c0_45 = arith.constant 0 : index
    %136 = vector.load %arg5[%c1_43, %c0_44, %c0_45] : memref<24x8x1xf32, #tpu.memory_space<vmem>>, vector<1x8x1xf32>
    %137 = vector.shape_cast %136 : vector<1x8x1xf32> to vector<8x1xf32>
    %138 = vector.extract_strided_slice %124 {offsets = [0, 0, 1], sizes = [2, 1, 12], strides = [1, 1, 1]} : vector<2x8x14xf32> to vector<2x1x12xf32>
    %139 = vector.shape_cast %137 : vector<8x1xf32> to vector<1x8x1xf32>
    %140 = vector.broadcast %139 : vector<1x8x1xf32> to vector<2x8x12xf32>
    %141 = vector.broadcast %138 : vector<2x1x12xf32> to vector<2x8x12xf32>
    %142 = arith.mulf %140, %141 : vector<2x8x12xf32>
    %143 = arith.addf %135, %142 : vector<2x8x12xf32>
    %c2_46 = arith.constant 2 : index
    %c0_47 = arith.constant 0 : index
    %c0_48 = arith.constant 0 : index
    %144 = vector.load %arg5[%c2_46, %c0_47, %c0_48] : memref<24x8x1xf32, #tpu.memory_space<vmem>>, vector<1x8x1xf32>
    %145 = vector.shape_cast %144 : vector<1x8x1xf32> to vector<8x1xf32>
    %146 = vector.extract_strided_slice %124 {offsets = [0, 0, 2], sizes = [2, 1, 12], strides = [1, 1, 1]} : vector<2x8x14xf32> to vector<2x1x12xf32>
    %147 = vector.shape_cast %145 : vector<8x1xf32> to vector<1x8x1xf32>
    %148 = vector.broadcast %147 : vector<1x8x1xf32> to vector<2x8x12xf32>
    %149 = vector.broadcast %146 : vector<2x1x12xf32> to vector<2x8x12xf32>
    %150 = arith.mulf %148, %149 : vector<2x8x12xf32>
    %151 = arith.addf %143, %150 : vector<2x8x12xf32>
    %c3_49 = arith.constant 3 : index
    %c0_50 = arith.constant 0 : index
    %c0_51 = arith.constant 0 : index
    %152 = vector.load %arg5[%c3_49, %c0_50, %c0_51] : memref<24x8x1xf32, #tpu.memory_space<vmem>>, vector<1x8x1xf32>
    %153 = vector.shape_cast %152 : vector<1x8x1xf32> to vector<8x1xf32>
    %154 = vector.extract_strided_slice %124 {offsets = [0, 1, 0], sizes = [2, 1, 12], strides = [1, 1, 1]} : vector<2x8x14xf32> to vector<2x1x12xf32>
    %155 = vector.shape_cast %153 : vector<8x1xf32> to vector<1x8x1xf32>
    %156 = vector.broadcast %155 : vector<1x8x1xf32> to vector<2x8x12xf32>
    %157 = vector.broadcast %154 : vector<2x1x12xf32> to vector<2x8x12xf32>
    %158 = arith.mulf %156, %157 : vector<2x8x12xf32>
    %159 = arith.addf %151, %158 : vector<2x8x12xf32>
    %c4_52 = arith.constant 4 : index
    %c0_53 = arith.constant 0 : index
    %c0_54 = arith.constant 0 : index
    %160 = vector.load %arg5[%c4_52, %c0_53, %c0_54] : memref<24x8x1xf32, #tpu.memory_space<vmem>>, vector<1x8x1xf32>
    %161 = vector.shape_cast %160 : vector<1x8x1xf32> to vector<8x1xf32>
    %162 = vector.extract_strided_slice %124 {offsets = [0, 1, 1], sizes = [2, 1, 12], strides = [1, 1, 1]} : vector<2x8x14xf32> to vector<2x1x12xf32>
    %163 = vector.shape_cast %161 : vector<8x1xf32> to vector<1x8x1xf32>
    %164 = vector.broadcast %163 : vector<1x8x1xf32> to vector<2x8x12xf32>
    %165 = vector.broadcast %162 : vector<2x1x12xf32> to vector<2x8x12xf32>
    %166 = arith.mulf %164, %165 : vector<2x8x12xf32>
    %167 = arith.addf %159, %166 : vector<2x8x12xf32>
    %c5_55 = arith.constant 5 : index
    %c0_56 = arith.constant 0 : index
    %c0_57 = arith.constant 0 : index
    %168 = vector.load %arg5[%c5_55, %c0_56, %c0_57] : memref<24x8x1xf32, #tpu.memory_space<vmem>>, vector<1x8x1xf32>
    %169 = vector.shape_cast %168 : vector<1x8x1xf32> to vector<8x1xf32>
    %170 = vector.extract_strided_slice %124 {offsets = [0, 1, 2], sizes = [2, 1, 12], strides = [1, 1, 1]} : vector<2x8x14xf32> to vector<2x1x12xf32>
    %171 = vector.shape_cast %169 : vector<8x1xf32> to vector<1x8x1xf32>
    %172 = vector.broadcast %171 : vector<1x8x1xf32> to vector<2x8x12xf32>
    %173 = vector.broadcast %170 : vector<2x1x12xf32> to vector<2x8x12xf32>
    %174 = arith.mulf %172, %173 : vector<2x8x12xf32>
    %175 = arith.addf %167, %174 : vector<2x8x12xf32>
    %c6_58 = arith.constant 6 : index
    %c0_59 = arith.constant 0 : index
    %c0_60 = arith.constant 0 : index
    %176 = vector.load %arg5[%c6_58, %c0_59, %c0_60] : memref<24x8x1xf32, #tpu.memory_space<vmem>>, vector<1x8x1xf32>
    %177 = vector.shape_cast %176 : vector<1x8x1xf32> to vector<8x1xf32>
    %178 = vector.extract_strided_slice %124 {offsets = [0, 2, 0], sizes = [2, 1, 12], strides = [1, 1, 1]} : vector<2x8x14xf32> to vector<2x1x12xf32>
    %179 = vector.shape_cast %177 : vector<8x1xf32> to vector<1x8x1xf32>
    %180 = vector.broadcast %179 : vector<1x8x1xf32> to vector<2x8x12xf32>
    %181 = vector.broadcast %178 : vector<2x1x12xf32> to vector<2x8x12xf32>
    %182 = arith.mulf %180, %181 : vector<2x8x12xf32>
    %183 = arith.addf %175, %182 : vector<2x8x12xf32>
    %c7_61 = arith.constant 7 : index
    %c0_62 = arith.constant 0 : index
    %c0_63 = arith.constant 0 : index
    %184 = vector.load %arg5[%c7_61, %c0_62, %c0_63] : memref<24x8x1xf32, #tpu.memory_space<vmem>>, vector<1x8x1xf32>
    %185 = vector.shape_cast %184 : vector<1x8x1xf32> to vector<8x1xf32>
    %186 = vector.extract_strided_slice %124 {offsets = [0, 2, 1], sizes = [2, 1, 12], strides = [1, 1, 1]} : vector<2x8x14xf32> to vector<2x1x12xf32>
    %187 = vector.shape_cast %185 : vector<8x1xf32> to vector<1x8x1xf32>
    %188 = vector.broadcast %187 : vector<1x8x1xf32> to vector<2x8x12xf32>
    %189 = vector.broadcast %186 : vector<2x1x12xf32> to vector<2x8x12xf32>
    %190 = arith.mulf %188, %189 : vector<2x8x12xf32>
    %191 = arith.addf %183, %190 : vector<2x8x12xf32>
    %c8_64 = arith.constant 8 : index
    %c0_65 = arith.constant 0 : index
    %c0_66 = arith.constant 0 : index
    %192 = vector.load %arg5[%c8_64, %c0_65, %c0_66] : memref<24x8x1xf32, #tpu.memory_space<vmem>>, vector<1x8x1xf32>
    %193 = vector.shape_cast %192 : vector<1x8x1xf32> to vector<8x1xf32>
    %194 = vector.extract_strided_slice %124 {offsets = [0, 2, 2], sizes = [2, 1, 12], strides = [1, 1, 1]} : vector<2x8x14xf32> to vector<2x1x12xf32>
    %195 = vector.shape_cast %193 : vector<8x1xf32> to vector<1x8x1xf32>
    %196 = vector.broadcast %195 : vector<1x8x1xf32> to vector<2x8x12xf32>
    %197 = vector.broadcast %194 : vector<2x1x12xf32> to vector<2x8x12xf32>
    %198 = arith.mulf %196, %197 : vector<2x8x12xf32>
    %199 = arith.addf %191, %198 : vector<2x8x12xf32>
    %c9_67 = arith.constant 9 : index
    %c0_68 = arith.constant 0 : index
    %c0_69 = arith.constant 0 : index
    %200 = vector.load %arg5[%c9_67, %c0_68, %c0_69] : memref<24x8x1xf32, #tpu.memory_space<vmem>>, vector<1x8x1xf32>
    %201 = vector.shape_cast %200 : vector<1x8x1xf32> to vector<8x1xf32>
    %202 = vector.extract_strided_slice %124 {offsets = [0, 3, 0], sizes = [2, 1, 12], strides = [1, 1, 1]} : vector<2x8x14xf32> to vector<2x1x12xf32>
    %203 = vector.shape_cast %201 : vector<8x1xf32> to vector<1x8x1xf32>
    %204 = vector.broadcast %203 : vector<1x8x1xf32> to vector<2x8x12xf32>
    %205 = vector.broadcast %202 : vector<2x1x12xf32> to vector<2x8x12xf32>
    %206 = arith.mulf %204, %205 : vector<2x8x12xf32>
    %207 = arith.addf %199, %206 : vector<2x8x12xf32>
    %c10_70 = arith.constant 10 : index
    %c0_71 = arith.constant 0 : index
    %c0_72 = arith.constant 0 : index
    %208 = vector.load %arg5[%c10_70, %c0_71, %c0_72] : memref<24x8x1xf32, #tpu.memory_space<vmem>>, vector<1x8x1xf32>
    %209 = vector.shape_cast %208 : vector<1x8x1xf32> to vector<8x1xf32>
    %210 = vector.extract_strided_slice %124 {offsets = [0, 3, 1], sizes = [2, 1, 12], strides = [1, 1, 1]} : vector<2x8x14xf32> to vector<2x1x12xf32>
    %211 = vector.shape_cast %209 : vector<8x1xf32> to vector<1x8x1xf32>
    %212 = vector.broadcast %211 : vector<1x8x1xf32> to vector<2x8x12xf32>
    %213 = vector.broadcast %210 : vector<2x1x12xf32> to vector<2x8x12xf32>
    %214 = arith.mulf %212, %213 : vector<2x8x12xf32>
    %215 = arith.addf %207, %214 : vector<2x8x12xf32>
    %c11_73 = arith.constant 11 : index
    %c0_74 = arith.constant 0 : index
    %c0_75 = arith.constant 0 : index
    %216 = vector.load %arg5[%c11_73, %c0_74, %c0_75] : memref<24x8x1xf32, #tpu.memory_space<vmem>>, vector<1x8x1xf32>
    %217 = vector.shape_cast %216 : vector<1x8x1xf32> to vector<8x1xf32>
    %218 = vector.extract_strided_slice %124 {offsets = [0, 3, 2], sizes = [2, 1, 12], strides = [1, 1, 1]} : vector<2x8x14xf32> to vector<2x1x12xf32>
    %219 = vector.shape_cast %217 : vector<8x1xf32> to vector<1x8x1xf32>
    %220 = vector.broadcast %219 : vector<1x8x1xf32> to vector<2x8x12xf32>
    %221 = vector.broadcast %218 : vector<2x1x12xf32> to vector<2x8x12xf32>
    %222 = arith.mulf %220, %221 : vector<2x8x12xf32>
    %223 = arith.addf %215, %222 : vector<2x8x12xf32>
    %c12 = arith.constant 12 : index
    %c0_76 = arith.constant 0 : index
    %c0_77 = arith.constant 0 : index
    %224 = vector.load %arg5[%c12, %c0_76, %c0_77] : memref<24x8x1xf32, #tpu.memory_space<vmem>>, vector<1x8x1xf32>
    %225 = vector.shape_cast %224 : vector<1x8x1xf32> to vector<8x1xf32>
    %226 = vector.extract_strided_slice %124 {offsets = [0, 4, 0], sizes = [2, 1, 12], strides = [1, 1, 1]} : vector<2x8x14xf32> to vector<2x1x12xf32>
    %227 = vector.shape_cast %225 : vector<8x1xf32> to vector<1x8x1xf32>
    %228 = vector.broadcast %227 : vector<1x8x1xf32> to vector<2x8x12xf32>
    %229 = vector.broadcast %226 : vector<2x1x12xf32> to vector<2x8x12xf32>
    %230 = arith.mulf %228, %229 : vector<2x8x12xf32>
    %231 = arith.addf %223, %230 : vector<2x8x12xf32>
    %c13 = arith.constant 13 : index
    %c0_78 = arith.constant 0 : index
    %c0_79 = arith.constant 0 : index
    %232 = vector.load %arg5[%c13, %c0_78, %c0_79] : memref<24x8x1xf32, #tpu.memory_space<vmem>>, vector<1x8x1xf32>
    %233 = vector.shape_cast %232 : vector<1x8x1xf32> to vector<8x1xf32>
    %234 = vector.extract_strided_slice %124 {offsets = [0, 4, 1], sizes = [2, 1, 12], strides = [1, 1, 1]} : vector<2x8x14xf32> to vector<2x1x12xf32>
    %235 = vector.shape_cast %233 : vector<8x1xf32> to vector<1x8x1xf32>
    %236 = vector.broadcast %235 : vector<1x8x1xf32> to vector<2x8x12xf32>
    %237 = vector.broadcast %234 : vector<2x1x12xf32> to vector<2x8x12xf32>
    %238 = arith.mulf %236, %237 : vector<2x8x12xf32>
    %239 = arith.addf %231, %238 : vector<2x8x12xf32>
    %c14 = arith.constant 14 : index
    %c0_80 = arith.constant 0 : index
    %c0_81 = arith.constant 0 : index
    %240 = vector.load %arg5[%c14, %c0_80, %c0_81] : memref<24x8x1xf32, #tpu.memory_space<vmem>>, vector<1x8x1xf32>
    %241 = vector.shape_cast %240 : vector<1x8x1xf32> to vector<8x1xf32>
    %242 = vector.extract_strided_slice %124 {offsets = [0, 4, 2], sizes = [2, 1, 12], strides = [1, 1, 1]} : vector<2x8x14xf32> to vector<2x1x12xf32>
    %243 = vector.shape_cast %241 : vector<8x1xf32> to vector<1x8x1xf32>
    %244 = vector.broadcast %243 : vector<1x8x1xf32> to vector<2x8x12xf32>
    %245 = vector.broadcast %242 : vector<2x1x12xf32> to vector<2x8x12xf32>
    %246 = arith.mulf %244, %245 : vector<2x8x12xf32>
    %247 = arith.addf %239, %246 : vector<2x8x12xf32>
    %c15 = arith.constant 15 : index
    %c0_82 = arith.constant 0 : index
    %c0_83 = arith.constant 0 : index
    %248 = vector.load %arg5[%c15, %c0_82, %c0_83] : memref<24x8x1xf32, #tpu.memory_space<vmem>>, vector<1x8x1xf32>
    %249 = vector.shape_cast %248 : vector<1x8x1xf32> to vector<8x1xf32>
    %250 = vector.extract_strided_slice %124 {offsets = [0, 5, 0], sizes = [2, 1, 12], strides = [1, 1, 1]} : vector<2x8x14xf32> to vector<2x1x12xf32>
    %251 = vector.shape_cast %249 : vector<8x1xf32> to vector<1x8x1xf32>
    %252 = vector.broadcast %251 : vector<1x8x1xf32> to vector<2x8x12xf32>
    %253 = vector.broadcast %250 : vector<2x1x12xf32> to vector<2x8x12xf32>
    %254 = arith.mulf %252, %253 : vector<2x8x12xf32>
    %255 = arith.addf %247, %254 : vector<2x8x12xf32>
    %c16 = arith.constant 16 : index
    %c0_84 = arith.constant 0 : index
    %c0_85 = arith.constant 0 : index
    %256 = vector.load %arg5[%c16, %c0_84, %c0_85] : memref<24x8x1xf32, #tpu.memory_space<vmem>>, vector<1x8x1xf32>
    %257 = vector.shape_cast %256 : vector<1x8x1xf32> to vector<8x1xf32>
    %258 = vector.extract_strided_slice %124 {offsets = [0, 5, 1], sizes = [2, 1, 12], strides = [1, 1, 1]} : vector<2x8x14xf32> to vector<2x1x12xf32>
    %259 = vector.shape_cast %257 : vector<8x1xf32> to vector<1x8x1xf32>
    %260 = vector.broadcast %259 : vector<1x8x1xf32> to vector<2x8x12xf32>
    %261 = vector.broadcast %258 : vector<2x1x12xf32> to vector<2x8x12xf32>
    %262 = arith.mulf %260, %261 : vector<2x8x12xf32>
    %263 = arith.addf %255, %262 : vector<2x8x12xf32>
    %c17 = arith.constant 17 : index
    %c0_86 = arith.constant 0 : index
    %c0_87 = arith.constant 0 : index
    %264 = vector.load %arg5[%c17, %c0_86, %c0_87] : memref<24x8x1xf32, #tpu.memory_space<vmem>>, vector<1x8x1xf32>
    %265 = vector.shape_cast %264 : vector<1x8x1xf32> to vector<8x1xf32>
    %266 = vector.extract_strided_slice %124 {offsets = [0, 5, 2], sizes = [2, 1, 12], strides = [1, 1, 1]} : vector<2x8x14xf32> to vector<2x1x12xf32>
    %267 = vector.shape_cast %265 : vector<8x1xf32> to vector<1x8x1xf32>
    %268 = vector.broadcast %267 : vector<1x8x1xf32> to vector<2x8x12xf32>
    %269 = vector.broadcast %266 : vector<2x1x12xf32> to vector<2x8x12xf32>
    %270 = arith.mulf %268, %269 : vector<2x8x12xf32>
    %271 = arith.addf %263, %270 : vector<2x8x12xf32>
    %c18 = arith.constant 18 : index
    %c0_88 = arith.constant 0 : index
    %c0_89 = arith.constant 0 : index
    %272 = vector.load %arg5[%c18, %c0_88, %c0_89] : memref<24x8x1xf32, #tpu.memory_space<vmem>>, vector<1x8x1xf32>
    %273 = vector.shape_cast %272 : vector<1x8x1xf32> to vector<8x1xf32>
    %274 = vector.extract_strided_slice %124 {offsets = [0, 6, 0], sizes = [2, 1, 12], strides = [1, 1, 1]} : vector<2x8x14xf32> to vector<2x1x12xf32>
    %275 = vector.shape_cast %273 : vector<8x1xf32> to vector<1x8x1xf32>
    %276 = vector.broadcast %275 : vector<1x8x1xf32> to vector<2x8x12xf32>
    %277 = vector.broadcast %274 : vector<2x1x12xf32> to vector<2x8x12xf32>
    %278 = arith.mulf %276, %277 : vector<2x8x12xf32>
    %279 = arith.addf %271, %278 : vector<2x8x12xf32>
    %c19 = arith.constant 19 : index
    %c0_90 = arith.constant 0 : index
    %c0_91 = arith.constant 0 : index
    %280 = vector.load %arg5[%c19, %c0_90, %c0_91] : memref<24x8x1xf32, #tpu.memory_space<vmem>>, vector<1x8x1xf32>
    %281 = vector.shape_cast %280 : vector<1x8x1xf32> to vector<8x1xf32>
    %282 = vector.extract_strided_slice %124 {offsets = [0, 6, 1], sizes = [2, 1, 12], strides = [1, 1, 1]} : vector<2x8x14xf32> to vector<2x1x12xf32>
    %283 = vector.shape_cast %281 : vector<8x1xf32> to vector<1x8x1xf32>
    %284 = vector.broadcast %283 : vector<1x8x1xf32> to vector<2x8x12xf32>
    %285 = vector.broadcast %282 : vector<2x1x12xf32> to vector<2x8x12xf32>
    %286 = arith.mulf %284, %285 : vector<2x8x12xf32>
    %287 = arith.addf %279, %286 : vector<2x8x12xf32>
    %c20 = arith.constant 20 : index
    %c0_92 = arith.constant 0 : index
    %c0_93 = arith.constant 0 : index
    %288 = vector.load %arg5[%c20, %c0_92, %c0_93] : memref<24x8x1xf32, #tpu.memory_space<vmem>>, vector<1x8x1xf32>
    %289 = vector.shape_cast %288 : vector<1x8x1xf32> to vector<8x1xf32>
    %290 = vector.extract_strided_slice %124 {offsets = [0, 6, 2], sizes = [2, 1, 12], strides = [1, 1, 1]} : vector<2x8x14xf32> to vector<2x1x12xf32>
    %291 = vector.shape_cast %289 : vector<8x1xf32> to vector<1x8x1xf32>
    %292 = vector.broadcast %291 : vector<1x8x1xf32> to vector<2x8x12xf32>
    %293 = vector.broadcast %290 : vector<2x1x12xf32> to vector<2x8x12xf32>
    %294 = arith.mulf %292, %293 : vector<2x8x12xf32>
    %295 = arith.addf %287, %294 : vector<2x8x12xf32>
    %c21 = arith.constant 21 : index
    %c0_94 = arith.constant 0 : index
    %c0_95 = arith.constant 0 : index
    %296 = vector.load %arg5[%c21, %c0_94, %c0_95] : memref<24x8x1xf32, #tpu.memory_space<vmem>>, vector<1x8x1xf32>
    %297 = vector.shape_cast %296 : vector<1x8x1xf32> to vector<8x1xf32>
    %298 = vector.extract_strided_slice %124 {offsets = [0, 7, 0], sizes = [2, 1, 12], strides = [1, 1, 1]} : vector<2x8x14xf32> to vector<2x1x12xf32>
    %299 = vector.shape_cast %297 : vector<8x1xf32> to vector<1x8x1xf32>
    %300 = vector.broadcast %299 : vector<1x8x1xf32> to vector<2x8x12xf32>
    %301 = vector.broadcast %298 : vector<2x1x12xf32> to vector<2x8x12xf32>
    %302 = arith.mulf %300, %301 : vector<2x8x12xf32>
    %303 = arith.addf %295, %302 : vector<2x8x12xf32>
    %c22 = arith.constant 22 : index
    %c0_96 = arith.constant 0 : index
    %c0_97 = arith.constant 0 : index
    %304 = vector.load %arg5[%c22, %c0_96, %c0_97] : memref<24x8x1xf32, #tpu.memory_space<vmem>>, vector<1x8x1xf32>
    %305 = vector.shape_cast %304 : vector<1x8x1xf32> to vector<8x1xf32>
    %306 = vector.extract_strided_slice %124 {offsets = [0, 7, 1], sizes = [2, 1, 12], strides = [1, 1, 1]} : vector<2x8x14xf32> to vector<2x1x12xf32>
    %307 = vector.shape_cast %305 : vector<8x1xf32> to vector<1x8x1xf32>
    %308 = vector.broadcast %307 : vector<1x8x1xf32> to vector<2x8x12xf32>
    %309 = vector.broadcast %306 : vector<2x1x12xf32> to vector<2x8x12xf32>
    %310 = arith.mulf %308, %309 : vector<2x8x12xf32>
    %311 = arith.addf %303, %310 : vector<2x8x12xf32>
    %c23 = arith.constant 23 : index
    %c0_98 = arith.constant 0 : index
    %c0_99 = arith.constant 0 : index
    %312 = vector.load %arg5[%c23, %c0_98, %c0_99] : memref<24x8x1xf32, #tpu.memory_space<vmem>>, vector<1x8x1xf32>
    %313 = vector.shape_cast %312 : vector<1x8x1xf32> to vector<8x1xf32>
    %314 = vector.extract_strided_slice %124 {offsets = [0, 7, 2], sizes = [2, 1, 12], strides = [1, 1, 1]} : vector<2x8x14xf32> to vector<2x1x12xf32>
    %315 = vector.shape_cast %313 : vector<8x1xf32> to vector<1x8x1xf32>
    %316 = vector.broadcast %315 : vector<1x8x1xf32> to vector<2x8x12xf32>
    %317 = vector.broadcast %314 : vector<2x1x12xf32> to vector<2x8x12xf32>
    %318 = arith.mulf %316, %317 : vector<2x8x12xf32>
    %319 = arith.addf %311, %318 : vector<2x8x12xf32>
    %cst_100 = arith.constant dense<0.000000e+00> : vector<8xf32>
    %320 = vector.multi_reduction <add>, %319, %cst_100 [0, 2] : vector<2x8x12xf32> to vector<8xf32>
    %321 = vector.shape_cast %320 : vector<8xf32> to vector<1x8x1xf32>
    %cst_101 = arith.constant 0.0416666679 : f32
    %322 = vector.broadcast %cst_101 : f32 to vector<1x8x1xf32>
    %323 = arith.mulf %321, %322 : vector<1x8x1xf32>
    %324 = vector.broadcast %323 : vector<1x8x1xf32> to vector<2x8x12xf32>
    %325 = arith.subf %319, %324 : vector<2x8x12xf32>
    %326 = arith.mulf %325, %325 : vector<2x8x12xf32>
    %cst_102 = arith.constant dense<0.000000e+00> : vector<8xf32>
    %327 = vector.multi_reduction <add>, %326, %cst_102 [0, 2] : vector<2x8x12xf32> to vector<8xf32>
    %328 = vector.shape_cast %327 : vector<8xf32> to vector<1x8x1xf32>
    %cst_103 = arith.constant 0.0416666679 : f32
    %329 = vector.broadcast %cst_103 : f32 to vector<1x8x1xf32>
    %330 = arith.mulf %328, %329 : vector<1x8x1xf32>
    %c0_104 = arith.constant 0 : index
    %c0_105 = arith.constant 0 : index
    %331 = vector.load %arg7[%c0_104, %c0_105] : memref<8x1xf32, #tpu.memory_space<vmem>>, vector<8x1xf32>
    %cst_106 = arith.constant 9.99999974E-6 : f32
    %332 = vector.broadcast %cst_106 : f32 to vector<1x8x1xf32>
    %333 = arith.addf %330, %332 : vector<1x8x1xf32>
    %334 = math.rsqrt %333 : vector<1x8x1xf32>
    %335 = vector.shape_cast %331 : vector<8x1xf32> to vector<1x8x1xf32>
    %336 = arith.mulf %335, %334 : vector<1x8x1xf32>
    %337 = vector.broadcast %336 : vector<1x8x1xf32> to vector<2x8x12xf32>
    %338 = arith.mulf %325, %337 : vector<2x8x12xf32>
    %c0_107 = arith.constant 0 : index
    %c0_108 = arith.constant 0 : index
    %339 = vector.load %arg8[%c0_107, %c0_108] : memref<8x1xf32, #tpu.memory_space<vmem>>, vector<8x1xf32>
    %340 = vector.shape_cast %339 : vector<8x1xf32> to vector<1x8x1xf32>
    %341 = vector.broadcast %340 : vector<1x8x1xf32> to vector<2x8x12xf32>
    %342 = arith.addf %338, %341 : vector<2x8x12xf32>
    %cst_109 = arith.constant 0.000000e+00 : f32
    %343 = vector.broadcast %cst_109 : f32 to vector<2x8x12xf32>
    %344 = arith.maximumf %342, %343 : vector<2x8x12xf32>
    %c0_110 = arith.constant 0 : index
    %c0_111 = arith.constant 0 : index
    %c0_112 = arith.constant 0 : index
    %345 = vector.load %arg9[%c0_110, %c0_111, %c0_112] : memref<2x8x12xf32, #tpu.memory_space<vmem>>, vector<2x8x12xf32>
    tpu.vector_store %arg9[%c0_110, %c0_111, %c0_112], %344 {strides = array<i32>} : memref<2x8x12xf32, #tpu.memory_space<vmem>>, vector<2x8x12xf32>,
    return
  }
}

</mosaic_0001>

<llo_original>
// kernel: tpu_custom_call.1
$region0: #{tpu_custom_call.1}
  #allocation0 [shape = 'u32[]', space=smem, size = 0x4, offset = 0x4, fixed_abs, tag = 'smem constant byte address 0x4 - core index']
  #allocation1 [shape = 'u32[72,128]{1,0:T(1,128)}', space=vmem, size = 0x9000, scoped, tag = 'internal scratch']
  %s0 = inlined_call_operand.vmem [shape: f32[2,4,16], index: 0, kind: input, shape index: {}]
  %s1 = inlined_call_operand.vmem [shape: f32[12,8,1], index: 1, kind: input, shape index: {}]
  %s2 = inlined_call_operand.vmem [shape: f32[8,1], index: 2, kind: input, shape index: {}]
  %s3 = inlined_call_operand.vmem [shape: f32[8,1], index: 3, kind: input, shape index: {}]
  %s4 = inlined_call_operand.vmem [shape: f32[8,1], index: 4, kind: input, shape index: {}]
  %s5 = inlined_call_operand.vmem [shape: f32[24,8,1], index: 5, kind: input, shape index: {}]
  %s6 = inlined_call_operand.vmem [shape: f32[8,1], index: 6, kind: input, shape index: {}]
  %s7 = inlined_call_operand.vmem [shape: f32[8,1], index: 7, kind: input, shape index: {}]
  %s8 = inlined_call_operand.vmem [shape: f32[8,1], index: 8, kind: input, shape index: {}]
  %s9 = inlined_call_operand.hbm [shape: f32[2,8,12], index: 9, kind: output, shape index: {}]
  %s10 = sld [smem:[#allocation0]]
  $region46: #{tpu_custom_call.1} parent=0
    _
  %s12 = ssub.s32 1, %s10
  %s13 = scalar_select 0, %s12, %s10
  $region1: #{tpu_custom_call.1} parent=0
    #allocation2 [shape = 'u8[8192]{0}', space=vmem, size = 0x2000, scoped, tag = 'output window, operand 0, single buffered']
    #allocation3 [shape = 's32[1]{0}', space=sflag, size = 0x4, scoped, tag = 'scoped memory for tpu_custom_call.1']
    %14 = vsyncpa [#allocation3], 0
    // Predicated region
    $region2: #{tpu_custom_call.1} parent=1 // pred_check
      _
    $region3: #{tpu_custom_call.1} parent=1 // pred_check_branch
      %16 = sbr.rel (0) target = $region5
    $region4: #{tpu_custom_call.1} parent=1 // pred_region
      _
    $region5: #{tpu_custom_call.1} parent=1 // pred_fallthru
      _
    // Predicated region
    $region6: #{tpu_custom_call.1} parent=1 // pred_check
      _
    $region7: #{tpu_custom_call.1} parent=1 // pred_check_branch
      %18 = sbr.rel (0) target = $region9
    $region8: #{tpu_custom_call.1} parent=1 // pred_region
      _
    $region9: #{tpu_custom_call.1} parent=1 // pred_fallthru
      _
    // Predicated region
    $region10: #{tpu_custom_call.1} parent=1 // pred_check
      _
    $region11: #{tpu_custom_call.1} parent=1 // pred_check_branch
      %20 = sbr.rel (0) target = $region13
    $region12: #{tpu_custom_call.1} parent=1 // pred_region
      _
    $region13: #{tpu_custom_call.1} parent=1 // pred_fallthru
      _
    // Predicated region
    $region14: #{tpu_custom_call.1} parent=1 // pred_check
      _
    $region15: #{tpu_custom_call.1} parent=1 // pred_check_branch
      %22 = sbr.rel (0) target = $region17
    $region16: #{tpu_custom_call.1} parent=1 // pred_region
      _
    $region17: #{tpu_custom_call.1} parent=1 // pred_fallthru
      _
    // Predicated region
    $region18: #{tpu_custom_call.1} parent=1 // pred_check
      _
    $region19: #{tpu_custom_call.1} parent=1 // pred_check_branch
      %24 = sbr.rel (0) target = $region21
    $region20: #{tpu_custom_call.1} parent=1 // pred_region
      _
    $region21: #{tpu_custom_call.1} parent=1 // pred_fallthru
      _
    // Predicated region
    $region22: #{tpu_custom_call.1} parent=1 // pred_check
      _
    $region23: #{tpu_custom_call.1} parent=1 // pred_check_branch
      %26 = sbr.rel (0) target = $region25
    $region24: #{tpu_custom_call.1} parent=1 // pred_region
      _
    $region25: #{tpu_custom_call.1} parent=1 // pred_fallthru
      _
    // Predicated region
    $region26: #{tpu_custom_call.1} parent=1 // pred_check
      _
    $region27: #{tpu_custom_call.1} parent=1 // pred_check_branch
      %28 = sbr.rel (0) target = $region29
    $region28: #{tpu_custom_call.1} parent=1 // pred_region
      _
    $region29: #{tpu_custom_call.1} parent=1 // pred_fallthru
      _
    // Predicated region
    $region30: #{tpu_custom_call.1} parent=1 // pred_check
      _
    $region31: #{tpu_custom_call.1} parent=1 // pred_check_branch
      %30 = sbr.rel (0) target = $region33
    $region32: #{tpu_custom_call.1} parent=1 // pred_region
      _
    $region33: #{tpu_custom_call.1} parent=1 // pred_fallthru
      _
    // Predicated region
    $region34: #{tpu_custom_call.1} parent=1 // pred_check
      _
    $region35: #{tpu_custom_call.1} parent=1 // pred_check_branch
      %32 = sbr.rel (0) target = $region37
    $region36: #{tpu_custom_call.1} parent=1 // pred_region
      _
    $region37: #{tpu_custom_call.1} parent=1 // pred_fallthru
      _
    %v33 = vld [vmem:[%s0] sm:$0xf]
    %v34 = vld [vmem:[%s0 + $0x4] sm:$0xf]
    %v35 = vld [vmem:[%s2] sm:$0xff]
    %37 = vset.pattern.permute.xlu0 0
    %38 = vperm.xlu0 %37, %v35
    %v39 = vpop.permute.xlu0 %38
    %v41 = vld [vmem:[%s1] sm:$0xff]
    %43 = vset.pattern.permute.xlu0 0
    %44 = vperm.xlu0 %43, %v41
    %v45 = vpop.permute.xlu0 %44
    %v47 = vperm.slane %v33, 0
    %v48 = vperm.slane %v34, 0
    %v49 = vmul.f32 %v45, %v47
    %v50 = vmul.f32 %v45, %v48
    %v51 = vadd.f32 %v39, %v49
    %v52 = vadd.f32 %v39, %v50
    %s53 = scalar_lea.vmem %s1, 8
    %v54 = vld [vmem:[%s53] sm:$0xff]
    %56 = vset.pattern.permute.xlu0 0
    %57 = vperm.xlu0 %56, %v54
    %v58 = vpop.permute.xlu0 %57
    %v60 = vmul.f32 %v58, %v47
    %v61 = vmul.f32 %v58, %v48
    %64 = vrot.lane.b32.xlu0 %v60, 127
    %v65 = vpop.permute.xlu0 %64
    %66 = vrot.lane.b32.xlu0 %v61, 127
    %v67 = vpop.permute.xlu0 %66
    %v70 = vadd.f32 %v51, %v65
    %v71 = vadd.f32 %v52, %v67
    %s72 = scalar_lea.vmem %s1, 16
    %v73 = vld [vmem:[%s72] sm:$0xff]
    %75 = vset.pattern.permute.xlu0 0
    %76 = vperm.xlu0 %75, %v73
    %v77 = vpop.permute.xlu0 %76
    %v79 = vmul.f32 %v77, %v47
    %v80 = vmul.f32 %v77, %v48
    %83 = vrot.lane.b32.xlu0 %v79, 126
    %v84 = vpop.permute.xlu0 %83
    %85 = vrot.lane.b32.xlu0 %v80, 126
    %v86 = vpop.permute.xlu0 %85
    %v89 = vadd.f32 %v70, %v84
    %v90 = vadd.f32 %v71, %v86
    %s91 = scalar_lea.vmem %s1, 24
    %v92 = vld [vmem:[%s91] sm:$0xff]
    %94 = vset.pattern.permute.xlu0 0
    %95 = vperm.xlu0 %94, %v92
    %v96 = vpop.permute.xlu0 %95
    %v98 = vperm.slane %v33, 1
    %v99 = vperm.slane %v34, 1
    %v100 = vmul.f32 %v96, %v98
    %v101 = vmul.f32 %v96, %v99
    %v102 = vadd.f32 %v89, %v100
    %v103 = vadd.f32 %v90, %v101
    %s104 = scalar_lea.vmem %s1, 32
    %v105 = vld [vmem:[%s104] sm:$0xff]
    %107 = vset.pattern.permute.xlu0 0
    %108 = vperm.xlu0 %107, %v105
    %v109 = vpop.permute.xlu0 %108
    %v111 = vmul.f32 %v109, %v98
    %v112 = vmul.f32 %v109, %v99
    %115 = vrot.lane.b32.xlu0 %v111, 127
    %v116 = vpop.permute.xlu0 %115
    %117 = vrot.lane.b32.xlu0 %v112, 127
    %v118 = vpop.permute.xlu0 %117
    %v121 = vadd.f32 %v102, %v116
    %v122 = vadd.f32 %v103, %v118
    %s123 = scalar_lea.vmem %s1, 40
    %v124 = vld [vmem:[%s123] sm:$0xff]
    %126 = vset.pattern.permute.xlu0 0
    %127 = vperm.xlu0 %126, %v124
    %v128 = vpop.permute.xlu0 %127
    %v130 = vmul.f32 %v128, %v98
    %v131 = vmul.f32 %v128, %v99
    %134 = vrot.lane.b32.xlu0 %v130, 126
    %v135 = vpop.permute.xlu0 %134
    %136 = vrot.lane.b32.xlu0 %v131, 126
    %v137 = vpop.permute.xlu0 %136
    %v140 = vadd.f32 %v121, %v135
    %v141 = vadd.f32 %v122, %v137
    %s142 = scalar_lea.vmem %s1, 48
    %v143 = vld [vmem:[%s142] sm:$0xff]
    %145 = vset.pattern.permute.xlu0 0
    %146 = vperm.xlu0 %145, %v143
    %v147 = vpop.permute.xlu0 %146
    %v149 = vperm.slane %v33, 2
    %v150 = vperm.slane %v34, 2
    %v151 = vmul.f32 %v147, %v149
    %v152 = vmul.f32 %v147, %v150
    %v153 = vadd.f32 %v140, %v151
    %v154 = vadd.f32 %v141, %v152
    %s155 = scalar_lea.vmem %s1, 56
    %v156 = vld [vmem:[%s155] sm:$0xff]
    %158 = vset.pattern.permute.xlu0 0
    %159 = vperm.xlu0 %158, %v156
    %v160 = vpop.permute.xlu0 %159
    %v162 = vmul.f32 %v160, %v149
    %v163 = vmul.f32 %v160, %v150
    %166 = vrot.lane.b32.xlu0 %v162, 127
    %v167 = vpop.permute.xlu0 %166
    %168 = vrot.lane.b32.xlu0 %v163, 127
    %v169 = vpop.permute.xlu0 %168
    %v172 = vadd.f32 %v153, %v167
    %v173 = vadd.f32 %v154, %v169
    %s174 = scalar_lea.vmem %s1, 64
    %v175 = vld [vmem:[%s174] sm:$0xff]
    %177 = vset.pattern.permute.xlu0 0
    %178 = vperm.xlu0 %177, %v175
    %v179 = vpop.permute.xlu0 %178
    %v181 = vmul.f32 %v179, %v149
    %v182 = vmul.f32 %v179, %v150
    %185 = vrot.lane.b32.xlu0 %v181, 126
    %v186 = vpop.permute.xlu0 %185
    %187 = vrot.lane.b32.xlu0 %v182, 126
    %v188 = vpop.permute.xlu0 %187
    %v191 = vadd.f32 %v172, %v186
    %v192 = vadd.f32 %v173, %v188
    %s193 = scalar_lea.vmem %s1, 72
    %v194 = vld [vmem:[%s193] sm:$0xff]
    %196 = vset.pattern.permute.xlu0 0
    %197 = vperm.xlu0 %196, %v194
    %v198 = vpop.permute.xlu0 %197
    %v200 = vperm.slane %v33, 3
    %v201 = vperm.slane %v34, 3
    %v202 = vmul.f32 %v198, %v200
    %v203 = vmul.f32 %v198, %v201
    %v204 = vadd.f32 %v191, %v202
    %v205 = vadd.f32 %v192, %v203
    %s206 = scalar_lea.vmem %s1, 80
    %v207 = vld [vmem:[%s206] sm:$0xff]
    %209 = vset.pattern.permute.xlu0 0
    %210 = vperm.xlu0 %209, %v207
    %v211 = vpop.permute.xlu0 %210
    %v213 = vmul.f32 %v211, %v200
    %v214 = vmul.f32 %v211, %v201
    %217 = vrot.lane.b32.xlu0 %v213, 127
    %v218 = vpop.permute.xlu0 %217
    %219 = vrot.lane.b32.xlu0 %v214, 127
    %v220 = vpop.permute.xlu0 %219
    %v223 = vadd.f32 %v204, %v218
    %v224 = vadd.f32 %v205, %v220
    %s225 = scalar_lea.vmem %s1, 88
    %v226 = vld [vmem:[%s225] sm:$0xff]
    %228 = vset.pattern.permute.xlu0 0
    %229 = vperm.xlu0 %228, %v226
    %v230 = vpop.permute.xlu0 %229
    %v232 = vmul.f32 %v230, %v200
    %v233 = vmul.f32 %v230, %v201
    %236 = vrot.lane.b32.xlu0 %v232, 126
    %v237 = vpop.permute.xlu0 %236
    %238 = vrot.lane.b32.xlu0 %v233, 126
    %v239 = vpop.permute.xlu0 %238
    %v242 = vadd.f32 %v223, %v237
    %v243 = vadd.f32 %v224, %v239
    %vm244 = vcmask 113664
    %v245 = vsel %vm244, %v242, 0.0
    %v246 = vsel %vm244, %v243, 0.0
    %v247 = vadd.f32 %v245, %v246
    %248 = vadd.xlane.f32.xlu0 %v247
    %v249 = vpop.xlane.xlu0 %248
    %v250 = vmul.f32 %v249, 0.035714287
    %v251 = vsub.f32 %v242, %v250
    %v252 = vsub.f32 %v243, %v250
    %v253 = vmul.f32 %v251, %v251
    %v254 = vmul.f32 %v252, %v252
    %v255 = vsel %vm244, %v253, 0.0
    %v256 = vsel %vm244, %v254, 0.0
    %v257 = vadd.f32 %v255, %v256
    %258 = vadd.xlane.f32.xlu0 %v257
    %v259 = vpop.xlane.xlu0 %258
    %v260 = vmul.f32 %v259, 0.035714287
    %v261 = vld [vmem:[%s3] sm:$0xff]
    %v262 = vadd.f32 %v260, 1e-05
    %v263 = vrsqrt.pop %v262
    %v264 = vmul.f32 %v263, %v262
    %v265 = vmul.f32 %v264, %v263
    %v266 = vmul.f32 0.5, %v265
    %v267 = vsub.f32 1.5, %v266
    %v268 = vmul.f32 %v263, %v267
    %vm269 = vweird.f32 %v262
    %vm270 = vweird.f32 %v263
    %vm271 = vmor %vm269, %vm270
    %v272 = vsel %vm271, %v263, %v268
    %v273 = vmul.f32 %v261, %v272
    %275 = vset.pattern.permute.xlu0 0
    %276 = vperm.xlu0 %275, %v273
    %v277 = vpop.permute.xlu0 %276
    %v279 = vmul.f32 %v251, %v277
    %v280 = vmul.f32 %v252, %v277
    %v281 = vld [vmem:[%s4] sm:$0xff]
    %283 = vset.pattern.permute.xlu0 0
    %284 = vperm.xlu0 %283, %v281
    %v285 = vpop.permute.xlu0 %284
    %v287 = vadd.f32 %v279, %v285
    %v288 = vadd.f32 %v280, %v285
    %v289 = vmax.f32 %v287, 0.0
    %v290 = vmax.f32 %v288, 0.0
    %v291 = vld [vmem:[%s6] sm:$0xff]
    %293 = vset.pattern.permute.xlu0 0
    %294 = vperm.xlu0 %293, %v291
    %v295 = vpop.permute.xlu0 %294
    %v297 = vld [vmem:[%s5] sm:$0xff]
    %299 = vset.pattern.permute.xlu0 0
    %300 = vperm.xlu0 %299, %v297
    %v301 = vpop.permute.xlu0 %300
    %v303 = vperm.slane %v289, 0
    %v304 = vperm.slane %v290, 0
    %v305 = vmul.f32 %v301, %v303
    %v306 = vmul.f32 %v301, %v304
    %v307 = vadd.f32 %v295, %v305
    %v308 = vadd.f32 %v295, %v306
    %s309 = scalar_lea.vmem %s5, 8
    %v310 = vld [vmem:[%s309] sm:$0xff]
    %312 = vset.pattern.permute.xlu0 0
    %313 = vperm.xlu0 %312, %v310
    %v314 = vpop.permute.xlu0 %313
    %v316 = vmul.f32 %v314, %v303
    %v317 = vmul.f32 %v314, %v304
    %320 = vrot.lane.b32.xlu0 %v316, 127
    %v321 = vpop.permute.xlu0 %320
    %322 = vrot.lane.b32.xlu0 %v317, 127
    %v323 = vpop.permute.xlu0 %322
    %v326 = vadd.f32 %v307, %v321
    %v327 = vadd.f32 %v308, %v323
    %s328 = scalar_lea.vmem %s5, 16
    %v329 = vld [vmem:[%s328] sm:$0xff]
    %331 = vset.pattern.permute.xlu0 0
    %332 = vperm.xlu0 %331, %v329
    %v333 = vpop.permute.xlu0 %332
    %v335 = vmul.f32 %v333, %v303
    %v336 = vmul.f32 %v333, %v304
    %339 = vrot.lane.b32.xlu0 %v335, 126
    %v340 = vpop.permute.xlu0 %339
    %341 = vrot.lane.b32.xlu0 %v336, 126
    %v342 = vpop.permute.xlu0 %341
    %v345 = vadd.f32 %v326, %v340
    %v346 = vadd.f32 %v327, %v342
    %s347 = scalar_lea.vmem %s5, 24
    %v348 = vld [vmem:[%s347] sm:$0xff]
    %350 = vset.pattern.permute.xlu0 0
    %351 = vperm.xlu0 %350, %v348
    %v352 = vpop.permute.xlu0 %351
    %v354 = vperm.slane %v289, 1
    %v355 = vperm.slane %v290, 1
    %v356 = vmul.f32 %v352, %v354
    %v357 = vmul.f32 %v352, %v355
    %v358 = vadd.f32 %v345, %v356
    %v359 = vadd.f32 %v346, %v357
    %s360 = scalar_lea.vmem %s5, 32
    %v361 = vld [vmem:[%s360] sm:$0xff]
    %363 = vset.pattern.permute.xlu0 0
    %364 = vperm.xlu0 %363, %v361
    %v365 = vpop.permute.xlu0 %364
    %v367 = vmul.f32 %v365, %v354
    %v368 = vmul.f32 %v365, %v355
    %371 = vrot.lane.b32.xlu0 %v367, 127
    %v372 = vpop.permute.xlu0 %371
    %373 = vrot.lane.b32.xlu0 %v368, 127
    %v374 = vpop.permute.xlu0 %373
    %v377 = vadd.f32 %v358, %v372
    %v378 = vadd.f32 %v359, %v374
    %s379 = scalar_lea.vmem %s5, 40
    %v380 = vld [vmem:[%s379] sm:$0xff]
    %382 = vset.pattern.permute.xlu0 0
    %383 = vperm.xlu0 %382, %v380
    %v384 = vpop.permute.xlu0 %383
    %v386 = vmul.f32 %v384, %v354
    %v387 = vmul.f32 %v384, %v355
    %390 = vrot.lane.b32.xlu0 %v386, 126
    %v391 = vpop.permute.xlu0 %390
    %392 = vrot.lane.b32.xlu0 %v387, 126
    %v393 = vpop.permute.xlu0 %392
    %v396 = vadd.f32 %v377, %v391
    %v397 = vadd.f32 %v378, %v393
    %s398 = scalar_lea.vmem %s5, 48
    %v399 = vld [vmem:[%s398] sm:$0xff]
    %401 = vset.pattern.permute.xlu0 0
    %402 = vperm.xlu0 %401, %v399
    %v403 = vpop.permute.xlu0 %402
    %v405 = vperm.slane %v289, 2
    %v406 = vperm.slane %v290, 2
    %v407 = vmul.f32 %v403, %v405
    %v408 = vmul.f32 %v403, %v406
    %v409 = vadd.f32 %v396, %v407
    %v410 = vadd.f32 %v397, %v408
    %s411 = scalar_lea.vmem %s5, 56
    %v412 = vld [vmem:[%s411] sm:$0xff]
    %414 = vset.pattern.permute.xlu0 0
    %415 = vperm.xlu0 %414, %v412
    %v416 = vpop.permute.xlu0 %415
    %v418 = vmul.f32 %v416, %v405
    %v419 = vmul.f32 %v416, %v406
    %422 = vrot.lane.b32.xlu0 %v418, 127
    %v423 = vpop.permute.xlu0 %422
    %424 = vrot.lane.b32.xlu0 %v419, 127
    %v425 = vpop.permute.xlu0 %424
    %v428 = vadd.f32 %v409, %v423
    %v429 = vadd.f32 %v410, %v425
    %s430 = scalar_lea.vmem %s5, 64
    %v431 = vld [vmem:[%s430] sm:$0xff]
    %433 = vset.pattern.permute.xlu0 0
    %434 = vperm.xlu0 %433, %v431
    %v435 = vpop.permute.xlu0 %434
    %v437 = vmul.f32 %v435, %v405
    %v438 = vmul.f32 %v435, %v406
    %441 = vrot.lane.b32.xlu0 %v437, 126
    %v442 = vpop.permute.xlu0 %441
    %443 = vrot.lane.b32.xlu0 %v438, 126
    %v444 = vpop.permute.xlu0 %443
    %v447 = vadd.f32 %v428, %v442
    %v448 = vadd.f32 %v429, %v444
    %s449 = scalar_lea.vmem %s5, 72
    %v450 = vld [vmem:[%s449] sm:$0xff]
    %452 = vset.pattern.permute.xlu0 0
    %453 = vperm.xlu0 %452, %v450
    %v454 = vpop.permute.xlu0 %453
    %v456 = vperm.slane %v289, 3
    %v457 = vperm.slane %v290, 3
    %v458 = vmul.f32 %v454, %v456
    %v459 = vmul.f32 %v454, %v457
    %v460 = vadd.f32 %v447, %v458
    %v461 = vadd.f32 %v448, %v459
    %s462 = scalar_lea.vmem %s5, 80
    %v463 = vld [vmem:[%s462] sm:$0xff]
    %465 = vset.pattern.permute.xlu0 0
    %466 = vperm.xlu0 %465, %v463
    %v467 = vpop.permute.xlu0 %466
    %v469 = vmul.f32 %v467, %v456
    %v470 = vmul.f32 %v467, %v457
    %473 = vrot.lane.b32.xlu0 %v469, 127
    %v474 = vpop.permute.xlu0 %473
    %475 = vrot.lane.b32.xlu0 %v470, 127
    %v476 = vpop.permute.xlu0 %475
    %v479 = vadd.f32 %v460, %v474
    %v480 = vadd.f32 %v461, %v476
    %s481 = scalar_lea.vmem %s5, 88
    %v482 = vld [vmem:[%s481] sm:$0xff]
    %484 = vset.pattern.permute.xlu0 0
    %485 = vperm.xlu0 %484, %v482
    %v486 = vpop.permute.xlu0 %485
    %v488 = vmul.f32 %v486, %v456
    %v489 = vmul.f32 %v486, %v457
    %492 = vrot.lane.b32.xlu0 %v488, 126
    %v493 = vpop.permute.xlu0 %492
    %494 = vrot.lane.b32.xlu0 %v489, 126
    %v495 = vpop.permute.xlu0 %494
    %v498 = vadd.f32 %v479, %v493
    %v499 = vadd.f32 %v480, %v495
    %s500 = scalar_lea.vmem %s5, 96
    %v501 = vld [vmem:[%s500] sm:$0xff]
    %503 = vset.pattern.permute.xlu0 0
    %504 = vperm.xlu0 %503, %v501
    %v505 = vpop.permute.xlu0 %504
    %v507 = vperm.slane %v289, 4
    %v508 = vperm.slane %v290, 4
    %v509 = vmul.f32 %v505, %v507
    %v510 = vmul.f32 %v505, %v508
    %v511 = vadd.f32 %v498, %v509
    %v512 = vadd.f32 %v499, %v510
    %s513 = scalar_lea.vmem %s5, 104
    %v514 = vld [vmem:[%s513] sm:$0xff]
    %516 = vset.pattern.permute.xlu0 0
    %517 = vperm.xlu0 %516, %v514
    %v518 = vpop.permute.xlu0 %517
    %v520 = vmul.f32 %v518, %v507
    %v521 = vmul.f32 %v518, %v508
    %524 = vrot.lane.b32.xlu0 %v520, 127
    %v525 = vpop.permute.xlu0 %524
    %526 = vrot.lane.b32.xlu0 %v521, 127
    %v527 = vpop.permute.xlu0 %526
    %v530 = vadd.f32 %v511, %v525
    %v531 = vadd.f32 %v512, %v527
    %s532 = scalar_lea.vmem %s5, 112
    %v533 = vld [vmem:[%s532] sm:$0xff]
    %535 = vset.pattern.permute.xlu0 0
    %536 = vperm.xlu0 %535, %v533
    %v537 = vpop.permute.xlu0 %536
    %v539 = vmul.f32 %v537, %v507
    %v540 = vmul.f32 %v537, %v508
    %543 = vrot.lane.b32.xlu0 %v539, 126
    %v544 = vpop.permute.xlu0 %543
    %545 = vrot.lane.b32.xlu0 %v540, 126
    %v546 = vpop.permute.xlu0 %545
    %v549 = vadd.f32 %v530, %v544
    %v550 = vadd.f32 %v531, %v546
    %s551 = scalar_lea.vmem %s5, 120
    %v552 = vld [vmem:[%s551] sm:$0xff]
    %554 = vset.pattern.permute.xlu0 0
    %555 = vperm.xlu0 %554, %v552
    %v556 = vpop.permute.xlu0 %555
    %v558 = vperm.slane %v289, 5
    %v559 = vperm.slane %v290, 5
    %v560 = vmul.f32 %v556, %v558
    %v561 = vmul.f32 %v556, %v559
    %v562 = vadd.f32 %v549, %v560
    %v563 = vadd.f32 %v550, %v561
    %s564 = scalar_lea.vmem %s5, 128
    %v565 = vld [vmem:[%s564] sm:$0xff]
    %567 = vset.pattern.permute.xlu0 0
    %568 = vperm.xlu0 %567, %v565
    %v569 = vpop.permute.xlu0 %568
    %v571 = vmul.f32 %v569, %v558
    %v572 = vmul.f32 %v569, %v559
    %575 = vrot.lane.b32.xlu0 %v571, 127
    %v576 = vpop.permute.xlu0 %575
    %577 = vrot.lane.b32.xlu0 %v572, 127
    %v578 = vpop.permute.xlu0 %577
    %v581 = vadd.f32 %v562, %v576
    %v582 = vadd.f32 %v563, %v578
    %s583 = scalar_lea.vmem %s5, 136
    %v584 = vld [vmem:[%s583] sm:$0xff]
    %586 = vset.pattern.permute.xlu0 0
    %587 = vperm.xlu0 %586, %v584
    %v588 = vpop.permute.xlu0 %587
    %v590 = vmul.f32 %v588, %v558
    %v591 = vmul.f32 %v588, %v559
    %594 = vrot.lane.b32.xlu0 %v590, 126
    %v595 = vpop.permute.xlu0 %594
    %596 = vrot.lane.b32.xlu0 %v591, 126
    %v597 = vpop.permute.xlu0 %596
    %v600 = vadd.f32 %v581, %v595
    %v601 = vadd.f32 %v582, %v597
    %s602 = scalar_lea.vmem %s5, 144
    %v603 = vld [vmem:[%s602] sm:$0xff]
    %605 = vset.pattern.permute.xlu0 0
    %606 = vperm.xlu0 %605, %v603
    %v607 = vpop.permute.xlu0 %606
    %v609 = vperm.slane %v289, 6
    %v610 = vperm.slane %v290, 6
    %v611 = vmul.f32 %v607, %v609
    %v612 = vmul.f32 %v607, %v610
    %v613 = vadd.f32 %v600, %v611
    %v614 = vadd.f32 %v601, %v612
    %s615 = scalar_lea.vmem %s5, 152
    %v616 = vld [vmem:[%s615] sm:$0xff]
    %618 = vset.pattern.permute.xlu0 0
    %619 = vperm.xlu0 %618, %v616
    %v620 = vpop.permute.xlu0 %619
    %v622 = vmul.f32 %v620, %v609
    %v623 = vmul.f32 %v620, %v610
    %626 = vrot.lane.b32.xlu0 %v622, 127
    %v627 = vpop.permute.xlu0 %626
    %628 = vrot.lane.b32.xlu0 %v623, 127
    %v629 = vpop.permute.xlu0 %628
    %v632 = vadd.f32 %v613, %v627
    %v633 = vadd.f32 %v614, %v629
    %s634 = scalar_lea.vmem %s5, 160
    %v635 = vld [vmem:[%s634] sm:$0xff]
    %637 = vset.pattern.permute.xlu0 0
    %638 = vperm.xlu0 %637, %v635
    %v639 = vpop.permute.xlu0 %638
    %v641 = vmul.f32 %v639, %v609
    %v642 = vmul.f32 %v639, %v610
    %645 = vrot.lane.b32.xlu0 %v641, 126
    %v646 = vpop.permute.xlu0 %645
    %647 = vrot.lane.b32.xlu0 %v642, 126
    %v648 = vpop.permute.xlu0 %647
    %v651 = vadd.f32 %v632, %v646
    %v652 = vadd.f32 %v633, %v648
    %s653 = scalar_lea.vmem %s5, 168
    %v654 = vld [vmem:[%s653] sm:$0xff]
    %656 = vset.pattern.permute.xlu0 0
    %657 = vperm.xlu0 %656, %v654
    %v658 = vpop.permute.xlu0 %657
    %v660 = vperm.slane %v289, 7
    %v661 = vperm.slane %v290, 7
    %v662 = vmul.f32 %v658, %v660
    %v663 = vmul.f32 %v658, %v661
    %v664 = vadd.f32 %v651, %v662
    %v665 = vadd.f32 %v652, %v663
    %s666 = scalar_lea.vmem %s5, 176
    %v667 = vld [vmem:[%s666] sm:$0xff]
    %669 = vset.pattern.permute.xlu0 0
    %670 = vperm.xlu0 %669, %v667
    %v671 = vpop.permute.xlu0 %670
    %v673 = vmul.f32 %v671, %v660
    %v674 = vmul.f32 %v671, %v661
    %677 = vrot.lane.b32.xlu0 %v673, 127
    %v678 = vpop.permute.xlu0 %677
    %679 = vrot.lane.b32.xlu0 %v674, 127
    %v680 = vpop.permute.xlu0 %679
    %v683 = vadd.f32 %v664, %v678
    %v684 = vadd.f32 %v665, %v680
    %s685 = scalar_lea.vmem %s5, 184
    %v686 = vld [vmem:[%s685] sm:$0xff]
    %688 = vset.pattern.permute.xlu0 0
    %689 = vperm.xlu0 %688, %v686
    %v690 = vpop.permute.xlu0 %689
    %v692 = vmul.f32 %v690, %v660
    %v693 = vmul.f32 %v690, %v661
    %696 = vrot.lane.b32.xlu0 %v692, 126
    %v697 = vpop.permute.xlu0 %696
    %698 = vrot.lane.b32.xlu0 %v693, 126
    %v699 = vpop.permute.xlu0 %698
    %v702 = vadd.f32 %v683, %v697
    %v703 = vadd.f32 %v684, %v699
    %vm704 = vcmask 97280
    %v705 = vsel %vm704, %v702, 0.0
    %v706 = vsel %vm704, %v703, 0.0
    %v707 = vadd.f32 %v705, %v706
    %708 = vadd.xlane.f32.xlu0 %v707
    %v709 = vpop.xlane.xlu0 %708
    %v710 = vmul.f32 %v709, 0.041666668
    %v711 = vsub.f32 %v702, %v710
    %v712 = vsub.f32 %v703, %v710
    %v713 = vmul.f32 %v711, %v711
    %v714 = vmul.f32 %v712, %v712
    %v715 = vsel %vm704, %v713, 0.0
    %v716 = vsel %vm704, %v714, 0.0
    %v717 = vadd.f32 %v715, %v716
    %718 = vadd.xlane.f32.xlu0 %v717
    %v719 = vpop.xlane.xlu0 %718
    %v720 = vmul.f32 %v719, 0.041666668
    %v721 = vld [vmem:[%s7] sm:$0xff]
    %v722 = vadd.f32 %v720, 1e-05
    %v723 = vrsqrt.pop %v722
    %v724 = vmul.f32 %v723, %v722
    %v725 = vmul.f32 %v724, %v723
    %v726 = vmul.f32 0.5, %v725
    %v727 = vsub.f32 1.5, %v726
    %v728 = vmul.f32 %v723, %v727
    %vm729 = vweird.f32 %v722
    %vm730 = vweird.f32 %v723
    %vm731 = vmor %vm729, %vm730
    %v732 = vsel %vm731, %v723, %v728
    %v733 = vmul.f32 %v721, %v732
    %735 = vset.pattern.permute.xlu0 0
    %736 = vperm.xlu0 %735, %v733
    %v737 = vpop.permute.xlu0 %736
    %v739 = vmul.f32 %v711, %v737
    %v740 = vmul.f32 %v712, %v737
    %v741 = vld [vmem:[%s8] sm:$0xff]
    %743 = vset.pattern.permute.xlu0 0
    %744 = vperm.xlu0 %743, %v741
    %v745 = vpop.permute.xlu0 %744
    %v747 = vadd.f32 %v739, %v745
    %v748 = vadd.f32 %v740, %v745
    %v749 = vmax.f32 %v747, 0.0
    %v750 = vmax.f32 %v748, 0.0
    %751 = vst.msk [vmem:[#allocation2] sm:$0xff] %vm704, %v749
    %752 = vst.msk [vmem:[#allocation2 + $0x8] sm:$0xff] %vm704, %v750
    // Predicated region
    $region38: #{tpu_custom_call.1} parent=1 // pred_check
      _
    $region39: #{tpu_custom_call.1} parent=1 // pred_check_branch
      %754 = sbr.rel (0) target = $region41
    $region40: #{tpu_custom_call.1} parent=1 // pred_region
      %756 = vsyncadd [#allocation3], 0
      %s757 = sshll.u32 [#allocation2], 4
      %s758 = int_to_ptr.vmem [resolvable:$true] %s757
      %s759 = sshll.u32 %s9, 4
      %s760 = int_to_ptr.hbm [resolvable:$true] %s759
      %765 = dma.vmem_to_hbm [thread:$0]  %s758, 256, %s760, [#allocation3], 128, 128, 8
    $region41: #{tpu_custom_call.1} parent=1 // pred_fallthru
      _
    // Predicated region
    $region42: #{tpu_custom_call.1} parent=1 // pred_check
      _
    $region43: #{tpu_custom_call.1} parent=1 // pred_check_branch
      %767 = sbr.rel (0) target = $region45
    $region44: #{tpu_custom_call.1} parent=1 // pred_region
      %769 = dma.done [#allocation3], 256
    $region45: #{tpu_custom_call.1} parent=1 // pred_fallthru
      _
    %770 = vsyncpa [#allocation3], 1

</llo_original>
